<compile_context>
chip_gen: v5e
topology: v5e:2x2
jax: 0.10.0
libtpu: 0.0.40
codegen_flags: <defaults>
</compile_context>

<pallas_src>
import jax
import jax.numpy as jnp
from jax.experimental import pallas as pl
from jax.experimental.pallas import tpu as pltpu


def _cdiv(a, b):
    return -(-a // b)


def _round_up(a, b):
    return _cdiv(a, b) * b


def _round_down(a, b):
    return (a // b) * b


def _vmem_capacity_bytes():
    """Physical per-core VMEM; conservative default if the query is unavailable."""
    try:
        info = pltpu.get_tpu_info()
        cap = getattr(info, "vmem_capacity_bytes", None)
        if cap:
            return int(cap)
    except Exception:
        pass
    return 64 * 1024 * 1024  # v7x per-TC figure -> always a safe lower bound


def _budgets():
    """(per-block in+out byte budget, scoped vmem_limit_bytes) for this chip."""
    cap = _vmem_capacity_bytes()
    if cap >= 100 * 1024 * 1024:            # v5e / v6e: 128 MiB physical VMEM
        return 16 * 1024 * 1024, 64 * 1024 * 1024
    return 12 * 1024 * 1024, 48 * 1024 * 1024   # v7x (64 MiB/TC) or unknown


def _evenize(total, tile, mult):
    """Best-effort shrink of `tile` so cdiv(total, tile) is even (TC balance)."""
    nb = _cdiv(total, tile)
    if nb <= 1 or nb % 2 == 0 or total <= tile:
        return tile
    new = max(mult, min(tile, _round_up(_cdiv(total, nb + 1), mult)))
    if _cdiv(total, new) % 2 == 0:
        return new
    return tile


def _add_pos_kernel(f_ref, pos_ref, o_ref):
    # pos block is (rt, 1) (broadcast over lanes) or (1, lt) (broadcast over
    # sublanes).  Promote-then-add matches PyTorch; the VPU add is fully hidden
    # under the HBM-bound DMA.
    o_ref[...] = (f_ref[...] + pos_ref[...]).astype(o_ref.dtype)


def learned_pos_embedding_2d(f, pos_embed, *, out_dtype=None):
    """f: (B, S, C, H, W); pos_embed: (S, C, 1, 1).  Returns f + broadcast(pos)."""
    B, S, C, H, W = f.shape
    assert pos_embed.shape == (S, C, 1, 1), (pos_embed.shape, (S, C, 1, 1))

    sc = S * C
    hw = H * W
    if out_dtype is None:
        # PyTorch promote-then-add (e.g. bf16 f + f32 pos -> f32 out).
        out_dtype = jnp.result_type(f.dtype, pos_embed.dtype)

    in_is = jnp.dtype(f.dtype).itemsize
    out_is = jnp.dtype(out_dtype).itemsize
    bpe = in_is + out_is                           # block bytes per element (in + out)
    sub_mult = max(8, 32 // min(in_is, out_is))    # dtype-native sublane packing
    budget, vmem_limit = _budgets()

    if hw % 128 == 0:
        # Lane-dense spatial layout: rows = (batch, seq, channel), lanes = H*W.
        pos_on_rows = True
        rows, lanes = B * sc, hw
        f2 = f.reshape(rows, lanes)
        # Broadcast pos over batch only (B*S*C elements, tiny) so row tiles need
        # no divisibility w.r.t. S*C and batch folding falls out for free.
        pos2 = jnp.broadcast_to(pos_embed.reshape(1, sc), (B, sc)).reshape(rows, 1)
    else:
        # H*W not a multiple of 128: fold (seq, channel, spatial) into the lane
        # axis so stores stay lane-dense.  pos is materialized once at S*C*H*W
        # elements, still << f traffic.
        pos_on_rows = False
        rows, lanes = B, sc * hw
        f2 = f.reshape(rows, lanes)
        pos2 = jnp.broadcast_to(pos_embed.reshape(sc, 1), (sc, hw)).reshape(1, lanes)

    # ---- block sizing: biggest (rt, lt) whose in+out bytes fit the budget ----
    if lanes <= 128 or sub_mult * lanes * bpe <= budget:
        lt = lanes                                             # full lane extent
    else:
        lt = min(lanes, max(128, _round_down(budget // (sub_mult * bpe), 128)))

    rows_fit = max(1, budget // (lt * bpe))                    # >= sub_mult by construction
    rt = min(rows, _round_down(max(rows_fit, sub_mult), sub_mult))
    if rt <= 0:
        rt = rows

    nb_rows = _cdiv(rows, rt)
    nb_lanes = _cdiv(lanes, lt)
    # Best-effort even block count on the axis that will lead the grid.
    if nb_rows >= nb_lanes:
        rt = _evenize(rows, rt, sub_mult)
        nb_rows = _cdiv(rows, rt)
    else:
        lt = _evenize(lanes, lt, 128)
        nb_lanes = _cdiv(lanes, lt)

    blk = (rt, lt)
    pblk = (rt, 1) if pos_on_rows else (1, lt)

    # Put the axis with the most blocks first (better 2-TC sharding on v7x).
    if nb_rows >= nb_lanes:
        grid = (nb_rows, nb_lanes)
        f_map = lambda r, l: (r, l)
        p_map = (lambda r, l: (r, 0)) if pos_on_rows else (lambda r, l: (0, l))
    else:
        grid = (nb_lanes, nb_rows)
        f_map = lambda l, r: (r, l)
        p_map = (lambda l, r: (r, 0)) if pos_on_rows else (lambda l, r: (0, l))

    n_elem = rows * lanes
    cost = pl.CostEstimate(
        flops=n_elem,
        transcendentals=0,
        bytes_accessed=n_elem * bpe + pos2.size * jnp.dtype(pos2.dtype).itemsize,
    )

    out = pl.pallas_call(
        _add_pos_kernel,
        out_shape=jax.ShapeDtypeStruct((rows, lanes), out_dtype),
        grid=grid,
        in_specs=[
            pl.BlockSpec(blk, f_map),
            pl.BlockSpec(pblk, p_map),
        ],
        out_specs=pl.BlockSpec(blk, f_map),
        compiler_params=pltpu.CompilerParams(
            dimension_semantics=("parallel", "parallel"),
            vmem_limit_bytes=vmem_limit,
        ),
        cost_estimate=cost,
    )(f2, pos2)

    return out.reshape(B, S, C, H, W)


if __name__ == "__main__":
    key = jax.random.PRNGKey(0)
    k_pos, k_f, k_f2 = jax.random.split(key, 3)

    B, S, C, H, W = 2, 8, 4, 16, 16   # H*W = 256 -> lane-dense spatial path
    # Matches nn.Parameter(torch.randn(S, C, 1, 1) * 0.02)
    pos_embed = jax.random.normal(k_pos, (S, C, 1, 1), dtype=jnp.float32) * 0.02
    f = jax.random.normal(k_f, (B, S, C, H, W), dtype=jnp.float32)

    # f32 path
    out = jax.block_until_ready(learned_pos_embedding_2d(f, pos_embed))
    ref = f + pos_embed[None]
    assert out.shape == ref.shape and out.dtype == ref.dtype
    assert jnp.allclose(out, ref, atol=1e-6), "f32 mismatch vs reference"

    # bf16 activations + f32 learned embedding (promote-then-add, like torch)
    f_bf16 = f.astype(jnp.bfloat16)
    out_bf = jax.block_until_ready(learned_pos_embedding_2d(f_bf16, pos_embed))
    ref_bf = f_bf16 + pos_embed[None]
    assert out_bf.dtype == ref_bf.dtype
    assert jnp.allclose(out_bf, ref_bf, atol=1e-6), "bf16 mismatch vs reference"

    # Fallback path: H*W not a multiple of 128 (spatial folded into the lane axis)
    H2 = W2 = 7
    f_small = jax.random.normal(k_f2, (B, S, C, H2, W2), dtype=jnp.float32)
    out2 = jax.block_until_ready(learned_pos_embedding_2d(f_small, pos_embed))
    ref2 = f_small + pos_embed[None]
    assert jnp.allclose(out2, ref2, atol=1e-6), "folded-lane path mismatch vs reference"

    print("KERNEL_OK")
</pallas_src>

<mosaic_0001>
module attributes {stable_mosaic.version = 11 : i64} {
  func.func @_add_pos_kernel(%arg0: i32, %arg1: i32, %arg2: memref<64x256xf32, #tpu.memory_space<vmem>>, %arg3: memref<64x1xf32, #tpu.memory_space<vmem>>, %arg4: memref<64x256xf32, #tpu.memory_space<vmem>>) attributes {dimension_semantics = [#tpu.dimension_semantics<parallel>, #tpu.dimension_semantics<parallel>], iteration_bounds = array<i64: 1, 1>, scalar_prefetch = 0 : i64, scratch_operands = 0 : i64, tpu.core_type = #tpu.core_type<tc>, window_params = [{transform_indices = @transform_0, window_bounds = array<i64: 64, 256>}, {transform_indices = @transform_1, window_bounds = array<i64: 64, 1>}, {transform_indices = @transform_2, window_bounds = array<i64: 64, 256>}]} {
    %c0 = arith.constant 0 : index
    %c0_0 = arith.constant 0 : index
    %0 = vector.load %arg2[%c0, %c0_0] : memref<64x256xf32, #tpu.memory_space<vmem>>, vector<64x256xf32>
    %c0_1 = arith.constant 0 : index
    %c0_2 = arith.constant 0 : index
    %1 = vector.load %arg3[%c0_1, %c0_2] : memref<64x1xf32, #tpu.memory_space<vmem>>, vector<64x1xf32>
    %2 = vector.broadcast %1 : vector<64x1xf32> to vector<64x256xf32>
    %3 = arith.addf %0, %2 : vector<64x256xf32>
    %c0_3 = arith.constant 0 : index
    %c0_4 = arith.constant 0 : index
    %4 = vector.load %arg4[%c0_3, %c0_4] : memref<64x256xf32, #tpu.memory_space<vmem>>, vector<64x256xf32>
    tpu.vector_store %arg4[%c0_3, %c0_4], %3 {strides = array<i32>} : memref<64x256xf32, #tpu.memory_space<vmem>>, vector<64x256xf32>,
    return
  }
  func.func @transform_0(%arg0: i32, %arg1: i32) -> (i32, i32) {
    %c0_i32 = arith.constant 0 : i32
    return %arg0, %arg1 : i32, i32
  }
  func.func @transform_1(%arg0: i32, %arg1: i32) -> (i32, i32) {
    %c0_i32 = arith.constant 0 : i32
    %c0_i32_0 = arith.constant 0 : i32
    return %arg0, %c0_i32 : i32, i32
  }
  func.func @transform_2(%arg0: i32, %arg1: i32) -> (i32, i32) {
    %c0_i32 = arith.constant 0 : i32
    return %arg0, %arg1 : i32, i32
  }
}

</mosaic_0001>

<llo_original>
// kernel: tpu_custom_call.1
$region0: #{tpu_custom_call.1}
  #allocation0 [shape = 'u32[]', space=smem, size = 0x4, offset = 0x4, fixed_abs, tag = 'smem constant byte address 0x4 - core index']
  #allocation1 [shape = 'u32[72,128]{1,0:T(1,128)}', space=vmem, size = 0x9000, scoped, tag = 'internal scratch']
  %s0 = inlined_call_operand.hbm [shape: f32[64,256], index: 0, kind: input, shape index: {}]
  %s1 = inlined_call_operand.vmem [shape: f32[64,1], index: 1, kind: input, shape index: {}]
  %s2 = inlined_call_operand.hbm [shape: f32[64,256], index: 2, kind: output, shape index: {}]
  %s3 = sld [smem:[#allocation0]]
  $region22: #{tpu_custom_call.1} parent=0
    _
  %s5 = ssub.s32 1, %s3
  %s6 = scalar_select 0, %s5, %s3
  $region1: #{tpu_custom_call.1} parent=0
    #allocation2 [shape = 'u8[65536]{0}', space=vmem, size = 0x10000, scoped, tag = 'input window, operand 0, single buffered']
    #allocation3 [shape = 's32[1]{0}', space=sflag, size = 0x4, scoped, tag = 'scoped memory for tpu_custom_call.1']
    #allocation4 [shape = 's32[1]{0}', space=sflag, size = 0x4, scoped, tag = 'scoped memory for tpu_custom_call.1']
    #allocation5 [shape = 'u8[65536]{0}', space=vmem, size = 0x10000, scoped, tag = 'output window, operand 0, single buffered']
    %7 = vsyncpa [#allocation3], 0
    %8 = vsyncpa [#allocation4], 0
    // Predicated region
    $region2: #{tpu_custom_call.1} parent=1 // pred_check
      _
    $region3: #{tpu_custom_call.1} parent=1 // pred_check_branch
      %10 = sbr.rel (0) target = $region5
    $region4: #{tpu_custom_call.1} parent=1 // pred_region
      %12 = vsyncadd [#allocation3], 0
      %s13 = sshll.u32 %s0, 4
      %s14 = int_to_ptr.hbm [resolvable:$true] %s13
      %s15 = sshll.u32 [#allocation2], 4
      %s16 = int_to_ptr.vmem [resolvable:$true] %s15
      %21 = dma.hbm_to_vmem [thread:$0]  %s14, 2048, %s16, [#allocation3], 256, 256, 16
    $region5: #{tpu_custom_call.1} parent=1 // pred_fallthru
      _
    // Predicated region
    $region6: #{tpu_custom_call.1} parent=1 // pred_check
      _
    $region7: #{tpu_custom_call.1} parent=1 // pred_check_branch
      %23 = sbr.rel (0) target = $region9
    $region8: #{tpu_custom_call.1} parent=1 // pred_region
      _
    $region9: #{tpu_custom_call.1} parent=1 // pred_fallthru
      _
    // Predicated region
    $region10: #{tpu_custom_call.1} parent=1 // pred_check
      _
    $region11: #{tpu_custom_call.1} parent=1 // pred_check_branch
      %25 = sbr.rel (0) target = $region13
    $region12: #{tpu_custom_call.1} parent=1 // pred_region
      %27 = dma.done [#allocation3], 2048
    $region13: #{tpu_custom_call.1} parent=1 // pred_fallthru
      _
    %v28 = vld [vmem:[#allocation2] sm:$0xff]
    %v29 = vld [vmem:[#allocation2 + $0x8] sm:$0xff]
    %v30 = vld [vmem:[#allocation2 + $0x10] sm:$0xff]
    %v31 = vld [vmem:[#allocation2 + $0x18] sm:$0xff]
    %v32 = vld [vmem:[#allocation2 + $0x20] sm:$0xff]
    %v33 = vld [vmem:[#allocation2 + $0x28] sm:$0xff]
    %v34 = vld [vmem:[#allocation2 + $0x30] sm:$0xff]
    %v35 = vld [vmem:[#allocation2 + $0x38] sm:$0xff]
    %v36 = vld [vmem:[#allocation2 + $0x40] sm:$0xff]
    %v37 = vld [vmem:[#allocation2 + $0x48] sm:$0xff]
    %v38 = vld [vmem:[#allocation2 + $0x50] sm:$0xff]
    %v39 = vld [vmem:[#allocation2 + $0x58] sm:$0xff]
    %v40 = vld [vmem:[#allocation2 + $0x60] sm:$0xff]
    %v41 = vld [vmem:[#allocation2 + $0x68] sm:$0xff]
    %v42 = vld [vmem:[#allocation2 + $0x70] sm:$0xff]
    %v43 = vld [vmem:[#allocation2 + $0x78] sm:$0xff]
    %v44 = vld [vmem:[%s1] sm:$0xff]
    %v45 = vld [vmem:[%s1 + $0x8] sm:$0xff]
    %v46 = vld [vmem:[%s1 + $0x10] sm:$0xff]
    %v47 = vld [vmem:[%s1 + $0x18] sm:$0xff]
    %v48 = vld [vmem:[%s1 + $0x20] sm:$0xff]
    %v49 = vld [vmem:[%s1 + $0x28] sm:$0xff]
    %v50 = vld [vmem:[%s1 + $0x30] sm:$0xff]
    %v51 = vld [vmem:[%s1 + $0x38] sm:$0xff]
    %53 = vset.pattern.permute.xlu0 0
    %54 = vperm.xlu0 %53, %v44
    %v55 = vpop.permute.xlu0 %54
    %58 = vset.pattern.permute.xlu0 0
    %59 = vperm.xlu0 %58, %v45
    %v60 = vpop.permute.xlu0 %59
    %63 = vset.pattern.permute.xlu0 0
    %64 = vperm.xlu0 %63, %v46
    %v65 = vpop.permute.xlu0 %64
    %68 = vset.pattern.permute.xlu0 0
    %69 = vperm.xlu0 %68, %v47
    %v70 = vpop.permute.xlu0 %69
    %73 = vset.pattern.permute.xlu0 0
    %74 = vperm.xlu0 %73, %v48
    %v75 = vpop.permute.xlu0 %74
    %78 = vset.pattern.permute.xlu0 0
    %79 = vperm.xlu0 %78, %v49
    %v80 = vpop.permute.xlu0 %79
    %83 = vset.pattern.permute.xlu0 0
    %84 = vperm.xlu0 %83, %v50
    %v85 = vpop.permute.xlu0 %84
    %88 = vset.pattern.permute.xlu0 0
    %89 = vperm.xlu0 %88, %v51
    %v90 = vpop.permute.xlu0 %89
    %v92 = vadd.f32 %v28, %v55
    %v93 = vadd.f32 %v29, %v55
    %v94 = vadd.f32 %v30, %v60
    %v95 = vadd.f32 %v31, %v60
    %v96 = vadd.f32 %v32, %v65
    %v97 = vadd.f32 %v33, %v65
    %v98 = vadd.f32 %v34, %v70
    %v99 = vadd.f32 %v35, %v70
    %v100 = vadd.f32 %v36, %v75
    %v101 = vadd.f32 %v37, %v75
    %v102 = vadd.f32 %v38, %v80
    %v103 = vadd.f32 %v39, %v80
    %v104 = vadd.f32 %v40, %v85
    %v105 = vadd.f32 %v41, %v85
    %v106 = vadd.f32 %v42, %v90
    %v107 = vadd.f32 %v43, %v90
    %108 = vst [vmem:[#allocation5] sm:$0xff] %v92
    %109 = vst [vmem:[#allocation5 + $0x8] sm:$0xff] %v93
    %110 = vst [vmem:[#allocation5 + $0x10] sm:$0xff] %v94
    %111 = vst [vmem:[#allocation5 + $0x18] sm:$0xff] %v95
    %112 = vst [vmem:[#allocation5 + $0x20] sm:$0xff] %v96
    %113 = vst [vmem:[#allocation5 + $0x28] sm:$0xff] %v97
    %114 = vst [vmem:[#allocation5 + $0x30] sm:$0xff] %v98
    %115 = vst [vmem:[#allocation5 + $0x38] sm:$0xff] %v99
    %116 = vst [vmem:[#allocation5 + $0x40] sm:$0xff] %v100
    %117 = vst [vmem:[#allocation5 + $0x48] sm:$0xff] %v101
    %118 = vst [vmem:[#allocation5 + $0x50] sm:$0xff] %v102
    %119 = vst [vmem:[#allocation5 + $0x58] sm:$0xff] %v103
    %120 = vst [vmem:[#allocation5 + $0x60] sm:$0xff] %v104
    %121 = vst [vmem:[#allocation5 + $0x68] sm:$0xff] %v105
    %122 = vst [vmem:[#allocation5 + $0x70] sm:$0xff] %v106
    %123 = vst [vmem:[#allocation5 + $0x78] sm:$0xff] %v107
    // Predicated region
    $region14: #{tpu_custom_call.1} parent=1 // pred_check
      _
    $region15: #{tpu_custom_call.1} parent=1 // pred_check_branch
      %125 = sbr.rel (0) target = $region17
    $region16: #{tpu_custom_call.1} parent=1 // pred_region
      %127 = vsyncadd [#allocation4], 0
      %s128 = sshll.u32 [#allocation5], 4
      %s129 = int_to_ptr.vmem [resolvable:$true] %s128
      %s130 = sshll.u32 %s2, 4
      %s131 = int_to_ptr.hbm [resolvable:$true] %s130
      %136 = dma.vmem_to_hbm [thread:$0]  %s129, 2048, %s131, [#allocation4], 256, 256, 16
    $region17: #{tpu_custom_call.1} parent=1 // pred_fallthru
      _
    // Predicated region
    $region18: #{tpu_custom_call.1} parent=1 // pred_check
      _
    $region19: #{tpu_custom_call.1} parent=1 // pred_check_branch
      %138 = sbr.rel (0) target = $region21
    $region20: #{tpu_custom_call.1} parent=1 // pred_region
      %140 = dma.done [#allocation4], 2048
    $region21: #{tpu_custom_call.1} parent=1 // pred_fallthru
      _
    %141 = vsyncpa [#allocation3], 1
    %142 = vsyncpa [#allocation4], 1

</llo_original>
